<compile_context>
chip_gen: v7x
topology: tpu7x:2x2x1
jax: 0.10.0
libtpu: 0.0.40
codegen_flags: <defaults>
</compile_context>

<pallas_src>
import jax
import jax.numpy as jnp
from jax.experimental import pallas as pl
from jax.experimental.pallas import tpu as pltpu


def _round_up(x, m):
    return (x + m - 1) // m * m


def local_layer_kernel(x_ref, w_ref, b_ref, o_ref):
    # x_ref: (block_rows, r*K*Cin)  lane-packed im2col rows (bf16/f32)
    # w_ref: (r*K*Cin, r*A)         block-diagonal fused conv*BN*linear weight
    # b_ref: (1, r*A)               fused bias tiled r times (f32)
    # o_ref: (block_rows, r*A)
    acc = jnp.dot(x_ref[...], w_ref[...], preferred_element_type=jnp.float32)
    o_ref[...] = (acc + b_ref[...]).astype(o_ref.dtype)


def _pick_block_rows(rows, in_row_bytes, out_row_bytes):
    """Rows per grid step: roofline-sized tiles computed from the *padded*
    VMEM layout (double-buffered in+out), >= 2 grid steps when there is enough
    work, and a v7x-safe (32 MiB scoped) VMEM footprint."""
    rows = max(int(rows), 1)
    per_row = 2 * (in_row_bytes + out_row_bytes)          # double-buffered in+out
    budget = 8 << 20                                      # ~8 MiB of pipelined blocks
    cap = max(8, (budget // max(per_row, 1)) // 8 * 8)
    br = min(cap, 1024)
    if rows > br:                                         # balance when only ~2 steps
        br = min(br, _round_up(pl.cdiv(rows, 2), 8))
    br = _round_up(min(br, max(rows, 8)), 8)
    return max(8, br)


def local_layer(x, conv_w, conv_b, bn_gamma, bn_beta, bn_mean, bn_var, lin_w,
                *, eps=1e-5, compute_dtype=jnp.bfloat16):
    """x: [B, 2, T] (PyTorch layout). Returns [B, T, attention_dim]."""
    B, Cin, T = x.shape
    F, _, K = conv_w.shape              # PyTorch Conv1d weight [out, in, k]
    A = lin_w.shape[0]                  # PyTorch Linear weight [out, in]
    assert K % 2 == 1, "'same' padding folding assumes an odd kernel size"
    pad = (K - 1) // 2
    KC = K * Cin
    out_dtype = x.dtype

    # ---- fold conv bias + eval-mode BN + linear into one weight / bias ----
    scale_v = bn_gamma * jax.lax.rsqrt(bn_var + eps)                     # [F]
    shift_v = (conv_b - bn_mean) * scale_v + bn_beta                     # [F]
    w_conv = jnp.transpose(conv_w, (2, 1, 0)).reshape(KC, F)             # [K*Cin, F]
    w_lin = jnp.transpose(lin_w, (1, 0))                                 # [F, A]
    w_fused = (w_conv.astype(jnp.float32)
               @ (scale_v[:, None] * w_lin).astype(jnp.float32))         # [K*Cin, A]
    b_fused = (shift_v.astype(jnp.float32)
               @ w_lin.astype(jnp.float32))                              # [A]

    # ---- im2col in the wrapper: x_col[b, t, k*Cin + c] = x_pad[b, t+k, c] ----
    x_cl = jnp.transpose(x, (0, 2, 1))                                   # [B, T, Cin]
    x_padt = jnp.pad(x_cl, ((0, 0), (pad, pad), (0, 0)))                 # [B, T+2p, Cin]
    x_col = jnp.concatenate([x_padt[:, k:k + T, :] for k in range(K)],
                            axis=-1)                                     # [B, T, K*Cin]

    # ---- lane-dense packing: r timesteps per row via a block-diagonal weight ----
    # (Output stays lane-dense whenever A divides 128; for other A, r = 1 and the
    # store falls back to an A-lane block.)
    r = (128 // A) if (A < 128 and 128 % A == 0) else 1
    T_pack = _round_up(T, r)
    if T_pack != T:
        x_col = jnp.pad(x_col, ((0, 0), (0, T_pack - T), (0, 0)))
    T_r = T_pack // r
    KCr, Ar = r * KC, r * A

    eye_r = jnp.eye(r, dtype=jnp.float32)
    w_bd = jnp.einsum("ij,ka->ikja", eye_r, w_fused).reshape(KCr, Ar)    # block-diag
    b_tiled = jnp.tile(b_fused.reshape(1, A), (1, r)).astype(jnp.float32)  # (1, r*A)

    x_rows = x_col.reshape(B * T_r, KCr)                                 # free reshape

    # bf16 MXU operands by default (f32 accumulation, f32 bias).
    if compute_dtype is not None:
        x_rows = x_rows.astype(compute_dtype)
        w_bd = w_bd.astype(compute_dtype)
    cdtype = x_rows.dtype

    # ---- tile the flattened (batch*time) row axis ----
    in_row_bytes = _round_up(KCr, 128) * jnp.dtype(cdtype).itemsize
    out_row_bytes = _round_up(Ar, 128) * jnp.dtype(out_dtype).itemsize
    rows = B * T_r
    block_rows = _pick_block_rows(rows, in_row_bytes, out_row_bytes)
    rows_padded = _round_up(rows, block_rows)
    if rows_padded != rows:
        x_rows = jnp.pad(x_rows, ((0, rows_padded - rows), (0, 0)))
    grid = (rows_padded // block_rows,)

    # Padded-layout VMEM accounting (lanes -> 128, sublanes -> 8,
    # double-buffered inputs / outputs / weights) so the declared limit
    # matches real usage — v7x (64 MiB physical, 32 MiB scoped) safe.
    w_bytes = _round_up(KCr, 8) * _round_up(Ar, 128) * jnp.dtype(cdtype).itemsize
    b_bytes = 8 * _round_up(Ar, 128) * 4
    blk_bytes = block_rows * (in_row_bytes + out_row_bytes)
    vmem_need = 2 * (blk_bytes + w_bytes + b_bytes)
    vmem_limit = int(min(32 << 20, max(16 << 20, vmem_need + (1 << 20))))

    out_rows = pl.pallas_call(
        local_layer_kernel,
        out_shape=jax.ShapeDtypeStruct((rows_padded, Ar), out_dtype),
        grid_spec=pltpu.PrefetchScalarGridSpec(
            num_scalar_prefetch=0,
            grid=grid,
            in_specs=[
                pl.BlockSpec((block_rows, KCr), lambda i: (i, 0)),
                pl.BlockSpec((KCr, Ar), lambda i: (0, 0)),
                pl.BlockSpec((1, Ar), lambda i: (0, 0)),
            ],
            out_specs=pl.BlockSpec((block_rows, Ar), lambda i: (i, 0)),
        ),
        compiler_params=pltpu.CompilerParams(
            dimension_semantics=("parallel",),
            vmem_limit_bytes=vmem_limit,
        ),
    )(x_rows, w_bd, b_tiled)

    # Undo the row / timestep packing (free row-major reshapes) and drop padding.
    return out_rows[:rows].reshape(B, T_pack, A)[:, :T, :]


def local_layer_ref(x, conv_w, conv_b, bn_gamma, bn_beta, bn_mean, bn_var, lin_w, *, eps=1e-5):
    """Pure-JAX reference matching the PyTorch forward (eval-mode BN)."""
    K = conv_w.shape[2]
    pad = (K - 1) // 2
    y = jax.lax.conv_general_dilated(
        x, conv_w, window_strides=(1,), padding=[(pad, pad)],
        dimension_numbers=("NCH", "OIH", "NCH"))
    y = y + conv_b[None, :, None]
    y = ((y - bn_mean[None, :, None]) * jax.lax.rsqrt(bn_var[None, :, None] + eps)
         * bn_gamma[None, :, None] + bn_beta[None, :, None])
    y = jnp.transpose(y, (0, 2, 1))                 # [B, T, F]
    return jnp.einsum("btf,af->bta", y, lin_w)      # linear, bias=False


if __name__ == "__main__":
    # Small shapes consistent with the module's forward.
    B, T = 2, 16                      # batch, max_time
    n_filters = 8                     # attention_location_n_filters
    K = 5                             # attention_location_kernel_size (odd -> 'same')
    attention_dim = 32

    key = jax.random.PRNGKey(0)
    ks = jax.random.split(key, 8)

    x = jax.random.normal(ks[0], (B, 2, T), dtype=jnp.float32)

    # Deterministic synthetic parameters (shapes follow the PyTorch module's __init__).
    conv_w = 0.2 * jax.random.normal(ks[1], (n_filters, 2, K), dtype=jnp.float32)
    conv_b = 0.1 * jax.random.normal(ks[2], (n_filters,), dtype=jnp.float32)
    bn_gamma = 1.0 + 0.1 * jax.random.normal(ks[3], (n_filters,), dtype=jnp.float32)
    bn_beta = 0.1 * jax.random.normal(ks[4], (n_filters,), dtype=jnp.float32)
    bn_mean = 0.1 * jax.random.normal(ks[5], (n_filters,), dtype=jnp.float32)
    bn_var = jax.random.uniform(ks[6], (n_filters,), minval=0.5, maxval=1.5, dtype=jnp.float32)
    lin_w = 0.2 * jax.random.normal(ks[7], (attention_dim, n_filters), dtype=jnp.float32)

    args = (x, conv_w, conv_b, bn_gamma, bn_beta, bn_mean, bn_var, lin_w)

    ref = local_layer_ref(*args)

    # Default path: bf16 MXU operands, f32 accumulation.
    out = jax.block_until_ready(local_layer(*args))
    assert out.shape == (B, T, attention_dim), out.shape
    err_bf16 = float(jnp.max(jnp.abs(out - ref)))
    assert jnp.allclose(out, ref, atol=2e-2, rtol=2e-2), err_bf16

    # f32-operand path matches the PyTorch module numerics tightly.
    out_f32 = jax.block_until_ready(local_layer(*args, compute_dtype=jnp.float32))
    err_f32 = float(jnp.max(jnp.abs(out_f32 - ref)))
    assert jnp.allclose(out_f32, ref, atol=2e-4, rtol=2e-4), err_f32

    print("KERNEL_OK")
</pallas_src>

<mosaic_0001>
module attributes {stable_mosaic.version = 11 : i64} {
  func.func @local_layer_kernel(%arg0: i32, %arg1: memref<8x40xbf16, #tpu.memory_space<vmem>>, %arg2: memref<40x128xbf16, #tpu.memory_space<vmem>>, %arg3: memref<1x128xf32, #tpu.memory_space<vmem>>, %arg4: memref<8x128xf32, #tpu.memory_space<vmem>>) attributes {dimension_semantics = [#tpu.dimension_semantics<parallel>], iteration_bounds = array<i64: 1>, scalar_prefetch = 0 : i64, scratch_operands = 0 : i64, tpu.core_type = #tpu.core_type<tc>, window_params = [{transform_indices = @transform_0, window_bounds = array<i64: 8, 40>}, {pipeline_mode = #tpu.pipeline_mode<synchronous>, transform_indices = @transform_1, window_bounds = array<i64: 40, 128>}, {pipeline_mode = #tpu.pipeline_mode<synchronous>, transform_indices = @transform_2, window_bounds = array<i64: 1, 128>}, {transform_indices = @transform_3, window_bounds = array<i64: 8, 128>}]} {
    %c0 = arith.constant 0 : index
    %c0_0 = arith.constant 0 : index
    %0 = vector.load %arg1[%c0, %c0_0] : memref<8x40xbf16, #tpu.memory_space<vmem>>, vector<8x40xbf16>
    %c0_1 = arith.constant 0 : index
    %c0_2 = arith.constant 0 : index
    %1 = vector.load %arg2[%c0_1, %c0_2] : memref<40x128xbf16, #tpu.memory_space<vmem>>, vector<40x128xbf16>
    %cst = arith.constant dense<0.000000e+00> : vector<8x128xf32>
    %2 = tpu.matmul %0, %1, %cst {dimension_numbers = #tpu.dot_dimension_numbers<[1], [0], [0], [1], [0, 0, 1, 1], [], []>} : vector<8x40xbf16>, vector<40x128xbf16>, vector<8x128xf32> -> vector<8x128xf32>
    %c0_3 = arith.constant 0 : index
    %c0_4 = arith.constant 0 : index
    %3 = vector.load %arg3[%c0_3, %c0_4] : memref<1x128xf32, #tpu.memory_space<vmem>>, vector<1x128xf32>
    %4 = vector.broadcast %3 : vector<1x128xf32> to vector<8x128xf32>
    %5 = arith.addf %2, %4 : vector<8x128xf32>
    %c0_5 = arith.constant 0 : index
    %c0_6 = arith.constant 0 : index
    %6 = vector.load %arg4[%c0_5, %c0_6] : memref<8x128xf32, #tpu.memory_space<vmem>>, vector<8x128xf32>
    tpu.vector_store %arg4[%c0_5, %c0_6], %5 {strides = array<i32>} : memref<8x128xf32, #tpu.memory_space<vmem>>, vector<8x128xf32>,
    return
  }
  func.func @transform_0(%arg0: i32) -> (i32, i32) {
    %c0_i32 = arith.constant 0 : i32
    %c0_i32_0 = arith.constant 0 : i32
    return %arg0, %c0_i32 : i32, i32
  }
  func.func @transform_1(%arg0: i32) -> (i32, i32) {
    %c0_i32 = arith.constant 0 : i32
    %c0_i32_0 = arith.constant 0 : i32
    %c0_i32_1 = arith.constant 0 : i32
    return %c0_i32, %c0_i32_0 : i32, i32
  }
  func.func @transform_2(%arg0: i32) -> (i32, i32) {
    %c0_i32 = arith.constant 0 : i32
    %c0_i32_0 = arith.constant 0 : i32
    %c0_i32_1 = arith.constant 0 : i32
    return %c0_i32, %c0_i32_0 : i32, i32
  }
  func.func @transform_3(%arg0: i32) -> (i32, i32) {
    %c0_i32 = arith.constant 0 : i32
    %c0_i32_0 = arith.constant 0 : i32
    return %arg0, %c0_i32 : i32, i32
  }
}

</mosaic_0001>

<llo_original>
// kernel: tpu_custom_call.1
$region0: #{tpu_custom_call.1}
  #allocation0 [shape = 'u32[]', space=smem, size = 0x4, offset = 0x4, fixed_abs, tag = 'smem constant byte address 0x4 - core index']
  #allocation1 [shape = 'u32[144,128]{1,0:T(1,128)}', space=vmem, size = 0x12000, scoped, tag = 'internal scratch']
  %s0 = inlined_call_operand.hbm [shape: bf16[8,40], index: 0, kind: input, shape index: {}]
  %s1 = inlined_call_operand.hbm [shape: bf16[40,128], index: 1, kind: input, shape index: {}]
  %s2 = inlined_call_operand.vmem [shape: f32[1,128], index: 2, kind: input, shape index: {}]
  %s3 = inlined_call_operand.hbm [shape: f32[8,128], index: 3, kind: output, shape index: {}]
  %s4 = sld [smem:[#allocation0]]
  $region30: #{tpu_custom_call.1} parent=0
    _
  %s6 = ssub.s32 1, %s4
  %s7 = scalar_select 0, %s6, %s4
  $region1: #{tpu_custom_call.1} parent=0
    #allocation2 [shape = 'u8[2048]{0}', space=vmem, size = 0x800, scoped, tag = 'input window, operand 0, single buffered']
    #allocation3 [shape = 's32[1]{0}', space=sflag, size = 0x4, scoped, tag = 'scoped memory for tpu_custom_call.1']
    #allocation4 [shape = 's32[1]{0}', space=sflag, size = 0x4, scoped, tag = 'scoped memory for tpu_custom_call.1']
    #allocation5 [shape = 'u8[10240]{0}', space=vmem, size = 0x2800, scoped, tag = 'input window, operand 1, single buffered']
    #allocation6 [shape = 's32[1]{0}', space=sflag, size = 0x4, scoped, tag = 'scoped memory for tpu_custom_call.1']
    #allocation7 [shape = 'u8[4096]{0}', space=vmem, size = 0x1000, scoped, tag = 'output window, operand 0, single buffered']
    %8 = vsyncpa [#allocation3], 0
    %9 = vsyncpa [#allocation6], 0
    %10 = vsyncpa [#allocation4], 0
    // Predicated region
    $region2: #{tpu_custom_call.1} parent=1 // pred_check
      _
    $region3: #{tpu_custom_call.1} parent=1 // pred_check_branch
      %12 = sbr.rel (0) target = $region5
    $region4: #{tpu_custom_call.1} parent=1 // pred_region
      %s14 = ssub.s32 64, 64
      %15 = vsyncadd [#allocation3], %s14
      %s17 = sshll.u32 [#allocation2], 4
      %s18 = int_to_ptr.vmem [resolvable:$true] %s17
      %20 = dma.hbm_to_vmem [thread:$0]  %s0, 64, %s18, [#allocation3]
    $region5: #{tpu_custom_call.1} parent=1 // pred_fallthru
      _
    // Predicated region
    $region6: #{tpu_custom_call.1} parent=1 // pred_check
      _
    $region7: #{tpu_custom_call.1} parent=1 // pred_check_branch
      %22 = sbr.rel (0) target = $region9
    $region8: #{tpu_custom_call.1} parent=1 // pred_region
      %s24 = ssub.s32 320, 320
      %25 = vsyncadd [#allocation6], %s24
      %s26 = sshll.u32 [#allocation5], 4
      %s27 = int_to_ptr.vmem [resolvable:$true] %s26
      %32 = dma.hbm_to_vmem [thread:$0]  %s1, 320, %s27, [#allocation6], 64, 64, 4
    $region9: #{tpu_custom_call.1} parent=1 // pred_fallthru
      _
    // Predicated region
    $region10: #{tpu_custom_call.1} parent=1 // pred_check
      _
    $region11: #{tpu_custom_call.1} parent=1 // pred_check_branch
      %34 = sbr.rel (0) target = $region13
    $region12: #{tpu_custom_call.1} parent=1 // pred_region
      _
    $region13: #{tpu_custom_call.1} parent=1 // pred_fallthru
      _
    // Predicated region
    $region14: #{tpu_custom_call.1} parent=1 // pred_check
      _
    $region15: #{tpu_custom_call.1} parent=1 // pred_check_branch
      %36 = sbr.rel (0) target = $region17
    $region16: #{tpu_custom_call.1} parent=1 // pred_region
      %37 = dma.done [#allocation3], 64
    $region17: #{tpu_custom_call.1} parent=1 // pred_fallthru
      _
    // Predicated region
    $region18: #{tpu_custom_call.1} parent=1 // pred_check
      _
    $region19: #{tpu_custom_call.1} parent=1 // pred_check_branch
      %39 = sbr.rel (0) target = $region21
    $region20: #{tpu_custom_call.1} parent=1 // pred_region
      %40 = dma.done [#allocation6], 320
    $region21: #{tpu_custom_call.1} parent=1 // pred_fallthru
      _
    %v42 = vld [vmem:[#allocation2] sm:$0xf]
    %v43 = vld [vmem:[#allocation5] sm:$0xf]
    %v44 = vld [vmem:[#allocation5 + $0x4] sm:$0xf]
    %v45 = vld [vmem:[#allocation5 + $0x8] sm:$0xf]
    %v46 = vld [vmem:[#allocation5 + $0xc] sm:$0xf]
    %v47 = vld [vmem:[#allocation5 + $0x10] sm:$0xf]
    %v48 = vld [vmem:[%s2] sm:$0x1]
    %v50 = vlaneseq
    %v51 = vshrl.u32 %v50, 7
    %v52 = vsub.s32 0, %v51
    %v53 = vrot.slane %v48, %v52
    %v60 = vunpack.c.l.b16 %v43
    %v61 = vunpack.c.l.b16 %v44
    %v62 = vunpack.c.l.b16 %v45
    %v63 = vunpack.c.l.b16 %v46
    %v64 = vunpack.c.l.b16 %v47
    %v65 = vpack.c.b16 %v61, %v60
    %v66 = vpack.c.b16 %v63, %v62
    %v67 = vpack.c.b16 %v64, %v64
    %vm70 = vcmask 326656
    %v72 = vsel %vm70, %v42, 0
    %vm74 = vcmask 1043456
    %v76 = vsel %vm74, %v67, 0
    %78 = vmatprep.subr.bf16.mxu0 0
    %79 = vmatpush1.bf16.msra.mxu0 %v65
    %80 = vmatprep.subr.bf16.mxu0 0
    %81 = vmatpush1.bf16.msra.mxu0 %v66
    %82 = vmatprep.subr.bf16.mxu0 0
    %83 = vmatpush1.bf16.msra.mxu0 %v76
    %84 = vmatprep.subr.bf16.mxu0 0
    %85 = vmatpush1.bf16.msra.mxu0 0
    %86 = vmatprep.subr.bf16.mxu0 0
    %87 = vmatpush1.bf16.msra.mxu0 0
    %88 = vmatprep.subr.bf16.mxu0 0
    %89 = vmatpush1.bf16.msra.mxu0 0
    %90 = vmatprep.subr.bf16.mxu0 0
    %91 = vmatpush1.bf16.msra.mxu0 0
    %92 = vmatprep.subr.bf16.mxu0 0
    %93 = vmatpush1.bf16.msra.mxu0 0
    %94 = vmatprep.subr.bf16.mxu0 0
    %95 = vmatpush1.bf16.msra.mxu0 0
    %96 = vmatprep.subr.bf16.mxu0 0
    %97 = vmatpush1.bf16.msra.mxu0 0
    %98 = vmatprep.subr.bf16.mxu0 0
    %99 = vmatpush1.bf16.msra.mxu0 0
    %100 = vmatprep.subr.bf16.mxu0 0
    %101 = vmatpush1.bf16.msra.mxu0 0
    %102 = vmatprep.subr.bf16.mxu0 0
    %103 = vmatpush1.bf16.msra.mxu0 0
    %104 = vmatprep.subr.bf16.mxu0 0
    %105 = vmatpush1.bf16.msra.mxu0 0
    %106 = vmatprep.subr.bf16.mxu0 0
    %107 = vmatpush1.bf16.msra.mxu0 0
    %108 = vmatprep.subr.bf16.mxu0 0
    %109 = vmatpush1.bf16.msra.mxu0 0
    %110 = vmatprep.mubr.bf16.mxu0 0
    %111 = vmatmul.mubr.bf16.gmra.mrb[0].mxu0 %v72
    %v112 = vpop.f32.mrb[0].mxu0
    %v113 = vadd.f32 %v53, %v112
    %v114 = vpop.f32.mrb[0].mxu0
    %v115 = vpop.f32.mrb[0].mxu0
    %v116 = vpop.f32.mrb[0].mxu0
    %117 = vdwg.mxu0
    %118 = vst [vmem:[#allocation7] sm:$0xff] %v113
    // Predicated region
    $region22: #{tpu_custom_call.1} parent=1 // pred_check
      _
    $region23: #{tpu_custom_call.1} parent=1 // pred_check_branch
      %120 = sbr.rel (0) target = $region25
    $region24: #{tpu_custom_call.1} parent=1 // pred_region
      %s122 = ssub.s32 128, 128
      %123 = vsyncadd [#allocation4], %s122
      %s125 = sshll.u32 [#allocation7], 4
      %s126 = int_to_ptr.vmem [resolvable:$true] %s125
      %128 = dma.vmem_to_hbm [thread:$0]  %s126, 128, %s3, [#allocation4]
    $region25: #{tpu_custom_call.1} parent=1 // pred_fallthru
      _
    // Predicated region
    $region26: #{tpu_custom_call.1} parent=1 // pred_check
      _
    $region27: #{tpu_custom_call.1} parent=1 // pred_check_branch
      %130 = sbr.rel (0) target = $region29
    $region28: #{tpu_custom_call.1} parent=1 // pred_region
      %131 = dma.done [#allocation4], 128
    $region29: #{tpu_custom_call.1} parent=1 // pred_fallthru
      _
    %132 = vsyncpa [#allocation3], 1
    %133 = vsyncpa [#allocation6], 1
    %134 = vsyncpa [#allocation4], 1

</llo_original>
